<compile_context>
chip_gen: v7x
topology: tpu7x:2x2x1
jax: 0.10.0
libtpu: 0.0.40
codegen_flags: <defaults>
</compile_context>

<pallas_src>
import jax
import jax.numpy as jnp
import numpy as np
from jax.experimental import pallas as pl
from jax.experimental.pallas import tpu as pltpu


# ----------------------------------------------------------------------------- helpers
def _round_up(x, m):
    return ((x + m - 1) // m) * m


def _choose_tiles(B, N):
    """Pick (B_pad, Bt, N_pad, Nt) so tiles are (8,128)-aligned and divide exactly."""
    # Lane axis: multiples of 128, capped at 512 lanes to keep pad waste small for
    # real meshes (SMPL 6890 -> 7168, SMPL-X 10475 -> 10752).
    Nt = min(_round_up(N, 128), 512)
    N_pad = _round_up(N, Nt)
    # Sublane axis: target ~Bt*Nt ~= 128k f32 elems (~512 KiB per plane tile).
    # 6 planes (3 in + 3 out), double-buffered: 12 * 512 KiB = 6 MiB < 16 MiB scoped
    # VMEM on v5e (smallest budget) and well under v7x's 64 MiB physical VMEM.
    target_rows = _round_up(max(8, (128 * 1024) // Nt), 8)
    Bt = min(_round_up(B, 8), target_rows)
    B_pad = _round_up(B, Bt)
    return B_pad, Bt, N_pad, Nt


# ----------------------------------------------------------------------------- kernel
def _project_kernel(krt_ref, x_ref, y_ref, z_ref, u_ref, v_ref, d_ref):
    """krt_ref: (12,) f32 SMEM = rows of [K@R | K@T]; x/y/z and u/v/d: (Bt, Nt) f32 VMEM."""
    x = x_ref[...]
    y = y_ref[...]
    z = z_ref[...]
    # homogeneous pixel coords: scalar * vector on the VPU (K=3 contraction -> no MXU)
    r0 = krt_ref[0] * x + krt_ref[1] * y + krt_ref[2] * z + krt_ref[3]
    r1 = krt_ref[4] * x + krt_ref[5] * y + krt_ref[6] * z + krt_ref[7]
    r2 = krt_ref[8] * x + krt_ref[9] * y + krt_ref[10] * z + krt_ref[11]
    # eps-clamp depth so vertices at / behind the camera plane don't produce inf/NaN
    sign = jnp.where(r2 >= 0.0, 1.0, -1.0)
    r2_safe = sign * jnp.maximum(jnp.abs(r2), 1e-6)
    inv = pl.reciprocal(r2_safe, approx=True)     # EUP (own VLIW slot)
    inv = inv * (2.0 - r2_safe * inv)             # one Newton step -> ~f32 accuracy
    u_ref[...] = r0 * inv                         # u
    v_ref[...] = r1 * inv                         # v
    d_ref[...] = r2                               # depth


# ----------------------------------------------------------------------------- wrapper
def project_vertices_pallas(vertices, K, R, T):
    """vertices: (B, N, 3); K, R: (1, 3, 3); T: (1, 3).

    Returns lane-dense coordinate planes (u, v, depth), each (B, N) f32 -- the layout a
    downstream rasterizer would consume directly (no repacking / transposes).
    """
    B, N, _ = vertices.shape
    M = K[0] @ R[0]                                    # (3, 3) = K @ R
    t = K[0] @ T[0]                                    # (3,)   = K @ T
    krt = jnp.concatenate([M, t[:, None]], axis=1)     # (3, 4)
    krt = krt.reshape(-1).astype(jnp.float32)          # (12,) -> tiny 1-D SMEM buffer

    B_pad, Bt, N_pad, Nt = _choose_tiles(B, N)
    v32 = vertices.astype(jnp.float32)
    if (B_pad, N_pad) != (B, N):
        v32 = jnp.pad(v32, ((0, B_pad - B), (0, N_pad - N), (0, 0)))
    # one fused strided-copy into three lane-dense planes (no transposes)
    x = v32[..., 0]
    y = v32[..., 1]
    z = v32[..., 2]

    grid = (B_pad // Bt, N_pad // Nt)
    plane_spec = pl.BlockSpec((Bt, Nt), lambda b, n: (b, n))
    out_sds = jax.ShapeDtypeStruct((B_pad, N_pad), jnp.float32)

    u, v, d = pl.pallas_call(
        _project_kernel,
        out_shape=(out_sds, out_sds, out_sds),
        grid=grid,
        in_specs=[
            pl.BlockSpec(memory_space=pltpu.MemorySpace.SMEM),   # (12,) camera matrix
            plane_spec, plane_spec, plane_spec,                  # x, y, z planes
        ],
        out_specs=(plane_spec, plane_spec, plane_spec),          # u, v, depth planes
        compiler_params=pltpu.CompilerParams(
            dimension_semantics=("parallel", "parallel")),       # both axes shardable (v7x)
    )(krt, x, y, z)

    if (B_pad, N_pad) != (B, N):
        u, v, d = u[:B, :N], v[:B, :N], d[:B, :N]
    return u, v, d


# ------------------------------------------------------------------- module-equivalent
def get_default_camera(focal_length, img_size):
    K = jnp.array([[[focal_length, 0.0, img_size / 2.0],
                    [0.0, focal_length, img_size / 2.0],
                    [0.0, 0.0, 1.0]]], dtype=jnp.float32)        # (1, 3, 3)
    R = jnp.eye(3, dtype=jnp.float32)[None]                       # (1, 3, 3)
    return K, R


class DifferentiableRenderer:
    """JAX/Pallas port of the buffer setup + projection hot path."""

    def __init__(self, img_size, focal_length, background_color=(0.0, 0.0, 0.0),
                 num_vertices=256, num_faces=128, key=None):
        self.img_size = img_size
        self.focal_length = focal_length
        self.background_color = background_color
        K, R = get_default_camera(focal_length, img_size)
        T = jnp.array([[0.0, 0.0, 2.5 * focal_length / img_size]], dtype=jnp.float32)

        if key is None:
            key = jax.random.PRNGKey(0)
        k1, k2, k3 = jax.random.split(key, 3)
        # Deterministic stand-ins for the texture / topology buffers (synthetic, no files).
        face_colors = jax.random.uniform(k1, (num_faces, 3, 3), dtype=jnp.float32)
        vertex_colors = jax.random.uniform(k2, (1, num_vertices, 3), dtype=jnp.float32)
        smpl_faces = jax.random.randint(k3, (num_faces, 3), 0, num_vertices, dtype=jnp.int32)

        self.K = K
        self.R = R
        self.T = T
        self.face_colors = face_colors
        self.vertex_colors = vertex_colors
        self.smpl_faces = smpl_faces

    def forward(self, vertices, faces=None, R=None, T=None):
        # Original forward() raises NotImplementedError; we expose the projection hot
        # path.  Returns (u, v, depth) coordinate planes, each (B, N).
        R = self.R if R is None else R
        T = self.T if T is None else T
        return project_vertices_pallas(vertices, self.K, R, T)

    __call__ = forward


# --------------------------------------------------------------------------------- main
if __name__ == "__main__":
    key = jax.random.PRNGKey(0)
    B, N = 2, 250                      # N not a multiple of 128 -> exercises padding
    img_size, focal_length = 16, 50.0

    renderer = DifferentiableRenderer(img_size, focal_length,
                                      num_vertices=N, num_faces=128,
                                      key=jax.random.PRNGKey(1))

    vertices = jax.random.normal(key, (B, N, 3), dtype=jnp.float32) * 0.5

    u, v, d = renderer(vertices)
    u, v, d = jax.block_until_ready((u, v, d))

    # pure-JAX reference of the same projection
    cam = jnp.einsum('ij,bnj->bni', renderer.R[0], vertices) + renderer.T[0]
    pix = jnp.einsum('ij,bnj->bni', renderer.K[0], cam)
    ref_u = pix[..., 0] / pix[..., 2]
    ref_v = pix[..., 1] / pix[..., 2]
    ref_d = pix[..., 2]

    np.testing.assert_allclose(np.asarray(u), np.asarray(ref_u), rtol=1e-4, atol=1e-4)
    np.testing.assert_allclose(np.asarray(v), np.asarray(ref_v), rtol=1e-4, atol=1e-4)
    np.testing.assert_allclose(np.asarray(d), np.asarray(ref_d), rtol=1e-4, atol=1e-4)
    print("KERNEL_OK")
</pallas_src>

<mosaic_0001>
module attributes {stable_mosaic.version = 11 : i64} {
  func.func @_project_kernel(%arg0: i32, %arg1: i32, %arg2: memref<12xf32, #tpu.memory_space<smem>>, %arg3: memref<8x256xf32, #tpu.memory_space<vmem>>, %arg4: memref<8x256xf32, #tpu.memory_space<vmem>>, %arg5: memref<8x256xf32, #tpu.memory_space<vmem>>, %arg6: memref<8x256xf32, #tpu.memory_space<vmem>>, %arg7: memref<8x256xf32, #tpu.memory_space<vmem>>, %arg8: memref<8x256xf32, #tpu.memory_space<vmem>>) attributes {dimension_semantics = [#tpu.dimension_semantics<parallel>, #tpu.dimension_semantics<parallel>], iteration_bounds = array<i64: 1, 1>, scalar_prefetch = 0 : i64, scratch_operands = 0 : i64, tpu.core_type = #tpu.core_type<tc>, window_params = [{transform_indices = @transform_0, window_bounds = array<i64: 12>}, {transform_indices = @transform_1, window_bounds = array<i64: 8, 256>}, {transform_indices = @transform_2, window_bounds = array<i64: 8, 256>}, {transform_indices = @transform_3, window_bounds = array<i64: 8, 256>}, {transform_indices = @transform_4, window_bounds = array<i64: 8, 256>}, {transform_indices = @transform_5, window_bounds = array<i64: 8, 256>}, {transform_indices = @transform_6, window_bounds = array<i64: 8, 256>}]} {
    %c0 = arith.constant 0 : index
    %c0_0 = arith.constant 0 : index
    %0 = vector.load %arg3[%c0, %c0_0] : memref<8x256xf32, #tpu.memory_space<vmem>>, vector<8x256xf32>
    %c0_1 = arith.constant 0 : index
    %c0_2 = arith.constant 0 : index
    %1 = vector.load %arg4[%c0_1, %c0_2] : memref<8x256xf32, #tpu.memory_space<vmem>>, vector<8x256xf32>
    %c0_3 = arith.constant 0 : index
    %c0_4 = arith.constant 0 : index
    %2 = vector.load %arg5[%c0_3, %c0_4] : memref<8x256xf32, #tpu.memory_space<vmem>>, vector<8x256xf32>
    %c0_5 = arith.constant 0 : index
    %3 = memref.load %arg2[%c0_5] : memref<12xf32, #tpu.memory_space<smem>>
    %4 = vector.broadcast %3 : f32 to vector<8x256xf32>
    %5 = arith.mulf %4, %0 : vector<8x256xf32>
    %c1 = arith.constant 1 : index
    %6 = memref.load %arg2[%c1] : memref<12xf32, #tpu.memory_space<smem>>
    %7 = vector.broadcast %6 : f32 to vector<8x256xf32>
    %8 = arith.mulf %7, %1 : vector<8x256xf32>
    %9 = arith.addf %5, %8 : vector<8x256xf32>
    %c2 = arith.constant 2 : index
    %10 = memref.load %arg2[%c2] : memref<12xf32, #tpu.memory_space<smem>>
    %11 = vector.broadcast %10 : f32 to vector<8x256xf32>
    %12 = arith.mulf %11, %2 : vector<8x256xf32>
    %13 = arith.addf %9, %12 : vector<8x256xf32>
    %c3 = arith.constant 3 : index
    %14 = memref.load %arg2[%c3] : memref<12xf32, #tpu.memory_space<smem>>
    %15 = vector.broadcast %14 : f32 to vector<8x256xf32>
    %16 = arith.addf %13, %15 : vector<8x256xf32>
    %c4 = arith.constant 4 : index
    %17 = memref.load %arg2[%c4] : memref<12xf32, #tpu.memory_space<smem>>
    %18 = vector.broadcast %17 : f32 to vector<8x256xf32>
    %19 = arith.mulf %18, %0 : vector<8x256xf32>
    %c5 = arith.constant 5 : index
    %20 = memref.load %arg2[%c5] : memref<12xf32, #tpu.memory_space<smem>>
    %21 = vector.broadcast %20 : f32 to vector<8x256xf32>
    %22 = arith.mulf %21, %1 : vector<8x256xf32>
    %23 = arith.addf %19, %22 : vector<8x256xf32>
    %c6 = arith.constant 6 : index
    %24 = memref.load %arg2[%c6] : memref<12xf32, #tpu.memory_space<smem>>
    %25 = vector.broadcast %24 : f32 to vector<8x256xf32>
    %26 = arith.mulf %25, %2 : vector<8x256xf32>
    %27 = arith.addf %23, %26 : vector<8x256xf32>
    %c7 = arith.constant 7 : index
    %28 = memref.load %arg2[%c7] : memref<12xf32, #tpu.memory_space<smem>>
    %29 = vector.broadcast %28 : f32 to vector<8x256xf32>
    %30 = arith.addf %27, %29 : vector<8x256xf32>
    %c8 = arith.constant 8 : index
    %31 = memref.load %arg2[%c8] : memref<12xf32, #tpu.memory_space<smem>>
    %32 = vector.broadcast %31 : f32 to vector<8x256xf32>
    %33 = arith.mulf %32, %0 : vector<8x256xf32>
    %c9 = arith.constant 9 : index
    %34 = memref.load %arg2[%c9] : memref<12xf32, #tpu.memory_space<smem>>
    %35 = vector.broadcast %34 : f32 to vector<8x256xf32>
    %36 = arith.mulf %35, %1 : vector<8x256xf32>
    %37 = arith.addf %33, %36 : vector<8x256xf32>
    %c10 = arith.constant 10 : index
    %38 = memref.load %arg2[%c10] : memref<12xf32, #tpu.memory_space<smem>>
    %39 = vector.broadcast %38 : f32 to vector<8x256xf32>
    %40 = arith.mulf %39, %2 : vector<8x256xf32>
    %41 = arith.addf %37, %40 : vector<8x256xf32>
    %c11 = arith.constant 11 : index
    %42 = memref.load %arg2[%c11] : memref<12xf32, #tpu.memory_space<smem>>
    %43 = vector.broadcast %42 : f32 to vector<8x256xf32>
    %44 = arith.addf %41, %43 : vector<8x256xf32>
    %cst = arith.constant 0.000000e+00 : f32
    %45 = vector.broadcast %cst : f32 to vector<8x256xf32>
    %46 = arith.cmpf oge, %44, %45 : vector<8x256xf32>
    %cst_6 = arith.constant 1.000000e+00 : f32
    %cst_7 = arith.constant -1.000000e+00 : f32
    %47 = vector.broadcast %cst_6 : f32 to vector<8x256xf32>
    %48 = vector.broadcast %cst_7 : f32 to vector<8x256xf32>
    %49 = arith.select %46, %47, %48 : vector<8x256xi1>, vector<8x256xf32>
    %50 = math.absf %44 : vector<8x256xf32>
    %cst_8 = arith.constant 9.99999997E-7 : f32
    %51 = vector.broadcast %cst_8 : f32 to vector<8x256xf32>
    %52 = arith.maximumf %50, %51 : vector<8x256xf32>
    %53 = arith.mulf %49, %52 : vector<8x256xf32>
    %54 = tpu.reciprocal %53 {approx = true} : vector<8x256xf32> -> vector<8x256xf32>
    %55 = arith.mulf %53, %54 : vector<8x256xf32>
    %cst_9 = arith.constant 2.000000e+00 : f32
    %56 = vector.broadcast %cst_9 : f32 to vector<8x256xf32>
    %57 = arith.subf %56, %55 : vector<8x256xf32>
    %58 = arith.mulf %54, %57 : vector<8x256xf32>
    %59 = arith.mulf %16, %58 : vector<8x256xf32>
    %c0_10 = arith.constant 0 : index
    %c0_11 = arith.constant 0 : index
    %60 = vector.load %arg6[%c0_10, %c0_11] : memref<8x256xf32, #tpu.memory_space<vmem>>, vector<8x256xf32>
    tpu.vector_store %arg6[%c0_10, %c0_11], %59 {strides = array<i32>} : memref<8x256xf32, #tpu.memory_space<vmem>>, vector<8x256xf32>,
    %61 = arith.mulf %30, %58 : vector<8x256xf32>
    %c0_12 = arith.constant 0 : index
    %c0_13 = arith.constant 0 : index
    %62 = vector.load %arg7[%c0_12, %c0_13] : memref<8x256xf32, #tpu.memory_space<vmem>>, vector<8x256xf32>
    tpu.vector_store %arg7[%c0_12, %c0_13], %61 {strides = array<i32>} : memref<8x256xf32, #tpu.memory_space<vmem>>, vector<8x256xf32>,
    %c0_14 = arith.constant 0 : index
    %c0_15 = arith.constant 0 : index
    %63 = vector.load %arg8[%c0_14, %c0_15] : memref<8x256xf32, #tpu.memory_space<vmem>>, vector<8x256xf32>
    tpu.vector_store %arg8[%c0_14, %c0_15], %44 {strides = array<i32>} : memref<8x256xf32, #tpu.memory_space<vmem>>, vector<8x256xf32>,
    return
  }
  func.func @transform_0(%arg0: i32, %arg1: i32) -> i32 {
    %c0_i32 = arith.constant 0 : i32
    %c0_i32_0 = arith.constant 0 : i32
    return %c0_i32 : i32
  }
  func.func @transform_1(%arg0: i32, %arg1: i32) -> (i32, i32) {
    %c0_i32 = arith.constant 0 : i32
    return %arg0, %arg1 : i32, i32
  }
  func.func @transform_2(%arg0: i32, %arg1: i32) -> (i32, i32) {
    %c0_i32 = arith.constant 0 : i32
    return %arg0, %arg1 : i32, i32
  }
  func.func @transform_3(%arg0: i32, %arg1: i32) -> (i32, i32) {
    %c0_i32 = arith.constant 0 : i32
    return %arg0, %arg1 : i32, i32
  }
  func.func @transform_4(%arg0: i32, %arg1: i32) -> (i32, i32) {
    %c0_i32 = arith.constant 0 : i32
    return %arg0, %arg1 : i32, i32
  }
  func.func @transform_5(%arg0: i32, %arg1: i32) -> (i32, i32) {
    %c0_i32 = arith.constant 0 : i32
    return %arg0, %arg1 : i32, i32
  }
  func.func @transform_6(%arg0: i32, %arg1: i32) -> (i32, i32) {
    %c0_i32 = arith.constant 0 : i32
    return %arg0, %arg1 : i32, i32
  }
}

</mosaic_0001>

<llo_original>
// kernel: tpu_custom_call.1
$region0: #{tpu_custom_call.1}
  #allocation0 [shape = 'u32[]', space=smem, size = 0x4, offset = 0x4, fixed_abs, tag = 'smem constant byte address 0x4 - core index']
  #allocation1 [shape = 'u32[144,128]{1,0:T(1,128)}', space=vmem, size = 0x12000, scoped, tag = 'internal scratch']
  %s0 = inlined_call_operand.hbm [shape: f32[12], index: 0, kind: input, shape index: {}]
  %s1 = inlined_call_operand.hbm [shape: f32[8,256], index: 1, kind: input, shape index: {}]
  %s2 = inlined_call_operand.hbm [shape: f32[8,256], index: 2, kind: input, shape index: {}]
  %s3 = inlined_call_operand.hbm [shape: f32[8,256], index: 3, kind: input, shape index: {}]
  %s4 = inlined_call_operand.hbm [shape: f32[8,256], index: 4, kind: output, shape index: {0}]
  %s5 = inlined_call_operand.hbm [shape: f32[8,256], index: 5, kind: output, shape index: {1}]
  %s6 = inlined_call_operand.hbm [shape: f32[8,256], index: 6, kind: output, shape index: {2}]
  %7 = xla_tuple %s4, %s5, %s6
  %s8 = sld [smem:[#allocation0]]
  $region58: #{tpu_custom_call.1} parent=0
    _
  %s10 = ssub.s32 1, %s8
  %s11 = scalar_select 0, %s10, %s8
  $region1: #{tpu_custom_call.1} parent=0
    #allocation2 [shape = 'u8[512]{0}', space=smem, size = 0x200, scoped, tag = 'input window, operand 0, single buffered']
    #allocation3 [shape = 's32[1]{0}', space=sflag, size = 0x4, scoped, tag = 'scoped memory for tpu_custom_call.1']
    #allocation4 [shape = 's32[1]{0}', space=sflag, size = 0x4, scoped, tag = 'scoped memory for tpu_custom_call.1']
    #allocation5 [shape = 's32[1]{0}', space=sflag, size = 0x4, scoped, tag = 'scoped memory for tpu_custom_call.1']
    #allocation6 [shape = 'u8[8192]{0}', space=vmem, size = 0x2000, scoped, tag = 'input window, operand 1, single buffered']
    #allocation7 [shape = 'u8[8192]{0}', space=vmem, size = 0x2000, scoped, tag = 'input window, operand 2, single buffered']
    #allocation8 [shape = 's32[1]{0}', space=sflag, size = 0x4, scoped, tag = 'scoped memory for tpu_custom_call.1']
    #allocation9 [shape = 'u8[8192]{0}', space=vmem, size = 0x2000, scoped, tag = 'input window, operand 3, single buffered']
    #allocation10 [shape = 'u8[8192]{0}', space=vmem, size = 0x2000, scoped, tag = 'output window, operand 0, single buffered']
    #allocation11 [shape = 'u8[8192]{0}', space=vmem, size = 0x2000, scoped, tag = 'output window, operand 1, single buffered']
    #allocation12 [shape = 's32[1]{0}', space=sflag, size = 0x4, scoped, tag = 'scoped memory for tpu_custom_call.1']
    #allocation13 [shape = 'u8[8192]{0}', space=vmem, size = 0x2000, scoped, tag = 'output window, operand 2, single buffered']
    %12 = vsyncpa [#allocation5], 0
    %13 = vsyncpa [#allocation3], 0
    %14 = vsyncpa [#allocation8], 0
    %15 = vsyncpa [#allocation4], 0
    %16 = vsyncpa [#allocation12], 0
    // Predicated region
    $region2: #{tpu_custom_call.1} parent=1 // pred_check
      _
    $region3: #{tpu_custom_call.1} parent=1 // pred_check_branch
      %18 = sbr.rel (0) target = $region5
    $region4: #{tpu_custom_call.1} parent=1 // pred_region
      %s20 = ssub.s32 16, 16
      %21 = vsyncadd [#allocation5], %s20
      %24 = dma.hbm_to_smem %s0, 16, [#allocation2], [#allocation5]
    $region5: #{tpu_custom_call.1} parent=1 // pred_fallthru
      _
    // Predicated region
    $region6: #{tpu_custom_call.1} parent=1 // pred_check
      _
    $region7: #{tpu_custom_call.1} parent=1 // pred_check_branch
      %26 = sbr.rel (0) target = $region9
    $region8: #{tpu_custom_call.1} parent=1 // pred_region
      %s28 = ssub.s32 256, 256
      %29 = vsyncadd [#allocation3], %s28
      %s31 = sshll.u32 [#allocation6], 4
      %s32 = int_to_ptr.vmem [resolvable:$true] %s31
      %34 = dma.hbm_to_vmem [thread:$0]  %s1, 256, %s32, [#allocation3]
    $region9: #{tpu_custom_call.1} parent=1 // pred_fallthru
      _
    // Predicated region
    $region10: #{tpu_custom_call.1} parent=1 // pred_check
      _
    $region11: #{tpu_custom_call.1} parent=1 // pred_check_branch
      %36 = sbr.rel (0) target = $region13
    $region12: #{tpu_custom_call.1} parent=1 // pred_region
      %s38 = ssub.s32 256, 256
      %39 = vsyncadd [#allocation8], %s38
      %s41 = sshll.u32 [#allocation7], 4
      %s42 = int_to_ptr.vmem [resolvable:$true] %s41
      %44 = dma.hbm_to_vmem [thread:$0]  %s2, 256, %s42, [#allocation8]
    $region13: #{tpu_custom_call.1} parent=1 // pred_fallthru
      _
    // Predicated region
    $region14: #{tpu_custom_call.1} parent=1 // pred_check
      _
    $region15: #{tpu_custom_call.1} parent=1 // pred_check_branch
      %46 = sbr.rel (0) target = $region17
    $region16: #{tpu_custom_call.1} parent=1 // pred_region
      %s48 = ssub.s32 256, 256
      %49 = vsyncadd [#allocation8], %s48
      %s51 = sshll.u32 [#allocation9], 4
      %s52 = int_to_ptr.vmem [resolvable:$true] %s51
      %54 = dma.hbm_to_vmem [thread:$0]  %s3, 256, %s52, [#allocation8]
    $region17: #{tpu_custom_call.1} parent=1 // pred_fallthru
      _
    // Predicated region
    $region18: #{tpu_custom_call.1} parent=1 // pred_check
      _
    $region19: #{tpu_custom_call.1} parent=1 // pred_check_branch
      %56 = sbr.rel (0) target = $region21
    $region20: #{tpu_custom_call.1} parent=1 // pred_region
      %57 = dma.done [#allocation5], 16
    $region21: #{tpu_custom_call.1} parent=1 // pred_fallthru
      _
    // Predicated region
    $region22: #{tpu_custom_call.1} parent=1 // pred_check
      _
    $region23: #{tpu_custom_call.1} parent=1 // pred_check_branch
      %59 = sbr.rel (0) target = $region25
    $region24: #{tpu_custom_call.1} parent=1 // pred_region
      %60 = dma.done [#allocation3], 256
    $region25: #{tpu_custom_call.1} parent=1 // pred_fallthru
      _
    // Predicated region
    $region26: #{tpu_custom_call.1} parent=1 // pred_check
      _
    $region27: #{tpu_custom_call.1} parent=1 // pred_check_branch
      %62 = sbr.rel (0) target = $region29
    $region28: #{tpu_custom_call.1} parent=1 // pred_region
      %63 = dma.done [#allocation8], 256
    $region29: #{tpu_custom_call.1} parent=1 // pred_fallthru
      _
    // Predicated region
    $region30: #{tpu_custom_call.1} parent=1 // pred_check
      _
    $region31: #{tpu_custom_call.1} parent=1 // pred_check_branch
      %65 = sbr.rel (0) target = $region33
    $region32: #{tpu_custom_call.1} parent=1 // pred_region
      %66 = dma.done [#allocation8], 256
    $region33: #{tpu_custom_call.1} parent=1 // pred_fallthru
      _
    %67 = sfence
    %v68 = vld [vmem:[#allocation6] sm:$0xff]
    %v69 = vld [vmem:[#allocation6 + $0x8] sm:$0xff]
    %v70 = vld [vmem:[#allocation7] sm:$0xff]
    %v71 = vld [vmem:[#allocation7 + $0x8] sm:$0xff]
    %v72 = vld [vmem:[#allocation9] sm:$0xff]
    %v73 = vld [vmem:[#allocation9 + $0x8] sm:$0xff]
    %s74 = sld [smem:[#allocation2]]
    %v75 = vstv %s74
    %v76 = vmul.f32 %v75, %v68
    %v77 = vmul.f32 %v75, %v69
    %s78 = sld [smem:[#allocation2 + $0x1]]
    %v79 = vstv %s78
    %v80 = vmul.f32 %v79, %v70
    %v81 = vmul.f32 %v79, %v71
    %v82 = vadd.f32 %v76, %v80
    %v83 = vadd.f32 %v77, %v81
    %s84 = sld [smem:[#allocation2 + $0x2]]
    %v85 = vstv %s84
    %v86 = vmul.f32 %v85, %v72
    %v87 = vmul.f32 %v85, %v73
    %v88 = vadd.f32 %v82, %v86
    %v89 = vadd.f32 %v83, %v87
    %s90 = sld [smem:[#allocation2 + $0x3]]
    %v91 = vstv %s90
    %v92 = vadd.f32 %v88, %v91
    %v93 = vadd.f32 %v89, %v91
    %s94 = sld [smem:[#allocation2 + $0x4]]
    %v95 = vstv %s94
    %v96 = vmul.f32 %v95, %v68
    %v97 = vmul.f32 %v95, %v69
    %s98 = sld [smem:[#allocation2 + $0x5]]
    %v99 = vstv %s98
    %v100 = vmul.f32 %v99, %v70
    %v101 = vmul.f32 %v99, %v71
    %v102 = vadd.f32 %v96, %v100
    %v103 = vadd.f32 %v97, %v101
    %s104 = sld [smem:[#allocation2 + $0x6]]
    %v105 = vstv %s104
    %v106 = vmul.f32 %v105, %v72
    %v107 = vmul.f32 %v105, %v73
    %v108 = vadd.f32 %v102, %v106
    %v109 = vadd.f32 %v103, %v107
    %s110 = sld [smem:[#allocation2 + $0x7]]
    %v111 = vstv %s110
    %v112 = vadd.f32 %v108, %v111
    %v113 = vadd.f32 %v109, %v111
    %s114 = sld [smem:[#allocation2 + $0x8]]
    %v115 = vstv %s114
    %v116 = vmul.f32 %v115, %v68
    %v117 = vmul.f32 %v115, %v69
    %s118 = sld [smem:[#allocation2 + $0x9]]
    %v119 = vstv %s118
    %v120 = vmul.f32 %v119, %v70
    %v121 = vmul.f32 %v119, %v71
    %v122 = vadd.f32 %v116, %v120
    %v123 = vadd.f32 %v117, %v121
    %s124 = sld [smem:[#allocation2 + $0xa]]
    %v125 = vstv %s124
    %v126 = vmul.f32 %v125, %v72
    %v127 = vmul.f32 %v125, %v73
    %v128 = vadd.f32 %v122, %v126
    %v129 = vadd.f32 %v123, %v127
    %s130 = sld [smem:[#allocation2 + $0xb]]
    %v131 = vstv %s130
    %v132 = vadd.f32 %v128, %v131
    %v133 = vadd.f32 %v129, %v131
    %vm134 = vcmp.ge.f32.partialorder %v132, 0.0
    %vm135 = vcmp.ge.f32.partialorder %v133, 0.0
    %v136 = vsel %vm134, 1.0, -1.0
    %v137 = vsel %vm135, 1.0, -1.0
    %v138 = vand.u32 2147483647, %v132
    %v139 = vand.u32 2147483647, %v133
    %v140 = vmax.f32 %v138, 1e-06
    %v141 = vmax.f32 %v139, 1e-06
    %v142 = vmul.f32 %v136, %v140
    %v143 = vmul.f32 %v137, %v141
    %v144 = vrcp.pop %v142
    %v145 = vrcp.pop %v143
    %v146 = vmul.f32 %v142, %v144
    %v147 = vmul.f32 %v143, %v145
    %v148 = vsub.f32 2.0, %v146
    %v149 = vsub.f32 2.0, %v147
    %v150 = vmul.f32 %v144, %v148
    %v151 = vmul.f32 %v145, %v149
    %v152 = vmul.f32 %v92, %v150
    %v153 = vmul.f32 %v93, %v151
    %154 = vst [vmem:[#allocation10] sm:$0xff] %v152
    %155 = vst [vmem:[#allocation10 + $0x8] sm:$0xff] %v153
    %v156 = vmul.f32 %v112, %v150
    %v157 = vmul.f32 %v113, %v151
    %158 = vst [vmem:[#allocation11] sm:$0xff] %v156
    %159 = vst [vmem:[#allocation11 + $0x8] sm:$0xff] %v157
    %160 = vst [vmem:[#allocation13] sm:$0xff] %v132
    %161 = vst [vmem:[#allocation13 + $0x8] sm:$0xff] %v133
    // Predicated region
    $region34: #{tpu_custom_call.1} parent=1 // pred_check
      _
    $region35: #{tpu_custom_call.1} parent=1 // pred_check_branch
      %163 = sbr.rel (0) target = $region37
    $region36: #{tpu_custom_call.1} parent=1 // pred_region
      %s165 = ssub.s32 256, 256
      %166 = vsyncadd [#allocation4], %s165
      %s168 = sshll.u32 [#allocation10], 4
      %s169 = int_to_ptr.vmem [resolvable:$true] %s168
      %171 = dma.vmem_to_hbm [thread:$0]  %s169, 256, %s4, [#allocation4]
    $region37: #{tpu_custom_call.1} parent=1 // pred_fallthru
      _
    // Predicated region
    $region38: #{tpu_custom_call.1} parent=1 // pred_check
      _
    $region39: #{tpu_custom_call.1} parent=1 // pred_check_branch
      %173 = sbr.rel (0) target = $region41
    $region40: #{tpu_custom_call.1} parent=1 // pred_region
      %s175 = ssub.s32 256, 256
      %176 = vsyncadd [#allocation12], %s175
      %s178 = sshll.u32 [#allocation11], 4
      %s179 = int_to_ptr.vmem [resolvable:$true] %s178
      %181 = dma.vmem_to_hbm [thread:$0]  %s179, 256, %s5, [#allocation12]
    $region41: #{tpu_custom_call.1} parent=1 // pred_fallthru
      _
    // Predicated region
    $region42: #{tpu_custom_call.1} parent=1 // pred_check
      _
    $region43: #{tpu_custom_call.1} parent=1 // pred_check_branch
      %183 = sbr.rel (0) target = $region45
    $region44: #{tpu_custom_call.1} parent=1 // pred_region
      %s185 = ssub.s32 256, 256
      %186 = vsyncadd [#allocation12], %s185
      %s188 = sshll.u32 [#allocation13], 4
      %s189 = int_to_ptr.vmem [resolvable:$true] %s188
      %191 = dma.vmem_to_hbm [thread:$0]  %s189, 256, %s6, [#allocation12]
    $region45: #{tpu_custom_call.1} parent=1 // pred_fallthru
      _
    // Predicated region
    $region46: #{tpu_custom_call.1} parent=1 // pred_check
      _
    $region47: #{tpu_custom_call.1} parent=1 // pred_check_branch
      %193 = sbr.rel (0) target = $region49
    $region48: #{tpu_custom_call.1} parent=1 // pred_region
      %194 = dma.done [#allocation4], 256
    $region49: #{tpu_custom_call.1} parent=1 // pred_fallthru
      _
    // Predicated region
    $region50: #{tpu_custom_call.1} parent=1 // pred_check
      _
    $region51: #{tpu_custom_call.1} parent=1 // pred_check_branch
      %196 = sbr.rel (0) target = $region53
    $region52: #{tpu_custom_call.1} parent=1 // pred_region
      %197 = dma.done [#allocation12], 256
    $region53: #{tpu_custom_call.1} parent=1 // pred_fallthru
      _
    // Predicated region
    $region54: #{tpu_custom_call.1} parent=1 // pred_check
      _
    $region55: #{tpu_custom_call.1} parent=1 // pred_check_branch
      %199 = sbr.rel (0) target = $region57
    $region56: #{tpu_custom_call.1} parent=1 // pred_region
      %200 = dma.done [#allocation12], 256
    $region57: #{tpu_custom_call.1} parent=1 // pred_fallthru
      _
    %201 = vsyncpa [#allocation3], 1
    %202 = vsyncpa [#allocation8], 1
    %203 = vsyncpa [#allocation4], 1
    %204 = vsyncpa [#allocation12], 1
    %205 = vsyncpa [#allocation5], 1

</llo_original>
